<compile_context>
chip_gen: v7x
topology: tpu7x:2x2x1
jax: 0.10.0
libtpu: 0.0.40
codegen_flags: <defaults>
</compile_context>

<pallas_src>
import jax
import jax.numpy as jnp
from jax import lax
from jax.experimental import pallas as pl
from jax.experimental.pallas import tpu as pltpu

_INV_SQRT2 = 0.7071067811865476


def _round_up(x, m):
    return ((x + m - 1) // m) * m


def _cdiv(a, b):
    return (a + b - 1) // b


def _make_mlp_kernel(acc_in_out, approx_gelu):
    def kernel(x_ref, w1_ref, b1_ref, w2_ref, b2_ref, o_ref, *scratch):
        acc_ref = o_ref if acc_in_out else scratch[0]
        k = pl.program_id(1)

        @pl.when(k == 0)
        def _init():
            # Fold the fc2 bias into the accumulator init: one broadcast per
            # M-tile instead of a [tm, C_out] add on every k-step.
            acc_ref[...] = jnp.broadcast_to(
                b2_ref[...].astype(acc_ref.dtype), acc_ref.shape)

        # fc1 on this hidden slice: [tm, C_in] @ [C_in, th] -> [tm, th], f32 acc.
        h = jnp.dot(x_ref[...], w1_ref[...], preferred_element_type=jnp.float32)
        h = h + b1_ref[...]
        if approx_gelu:
            # tanh-approx GELU -> transcendental goes to the EUP (its own VLIW
            # slot), freeing the VALU for the matmul-adjacent work.
            h = jax.nn.gelu(h, approximate=True)
        else:
            # Exact (erf-based) GELU -- matches torch.nn.GELU() default.
            h = 0.5 * h * (1.0 + lax.erf(h * _INV_SQRT2))
        # dropout(p=0.0) is identity in the forward pass -> elided.
        # fc2 partial product for this hidden slice, accumulated in f32.
        acc_ref[...] += jnp.dot(h.astype(w2_ref.dtype), w2_ref[...],
                                preferred_element_type=jnp.float32)

        if not acc_in_out:
            @pl.when(k == pl.num_programs(1) - 1)
            def _finalize():
                o_ref[...] = acc_ref[...].astype(o_ref.dtype)

    return kernel


def _vmem_budget_bytes():
    cap = None
    try:
        info = pltpu.get_tpu_info()
        cap = getattr(info, "vmem_capacity_bytes", None)
    except Exception:  # pragma: no cover - info query not available
        cap = None
    if cap is None:
        # Conservative fallback (v7x per-core size) so we never over-budget.
        cap = 64 * 1024 * 1024
    # ~100 MiB on 128 MiB parts (v5e/v6e), ~51 MiB on v7x.
    return int(cap * 0.8)


def _select_tiles(M, C_in_pad, H_pad128, C_out_pad, in_isize, out_isize,
                  acc_in_out, budget, tm_target, th_target):
    # Row alignment follows sublane packing: 8 rows (f32), 16 rows (bf16), 32 (i8).
    align = max(8, 32 // in_isize)

    th = min(_round_up(th_target, 128), H_pad128)

    tm_ub = _round_up(M, align)
    if M >= 2 * align:
        # Keep >= 2 M-tiles so the "parallel" axis can shard across v7x's 2 TCs.
        tm_ub = min(tm_ub, _round_up(_cdiv(M, 2), align))
    tm = max(align, min(_round_up(tm_target, align), tm_ub))

    def fits(tm_, th_):
        tot = (2 * tm_ * C_in_pad * in_isize        # x tile (double-buffered)
               + 2 * C_in_pad * th_ * in_isize      # w1 slice
               + 2 * th_ * 4                        # b1 slice
               + 2 * th_ * C_out_pad * in_isize     # w2 slice
               + 2 * C_out_pad * 4                  # b2
               + 2 * tm_ * C_out_pad * out_isize)   # output tile
        if not acc_in_out:
            tot += tm_ * C_out_pad * 4              # f32 accumulator scratch
        return tot <= budget * 0.9                  # headroom for compiler scratch

    while not fits(tm, th):
        if th > 256:                                # shrink th first (keep tm large:
            th = max(256, _round_up(th // 2, 128))  # arithmetic intensity ~ tm)
        elif tm > 256:
            tm = max(align, _round_up(tm // 2, align))
        elif th > 128:
            th = 128
        elif tm > align:
            tm = max(align, _round_up(tm // 2, align))
        else:
            break

    # Minimize tail padding: shrink tm to just cover M with the same tile count.
    n_tiles = _cdiv(M, tm)
    tm = max(align, _round_up(_cdiv(M, n_tiles), align))
    return tm, th


def mlp_pallas(x, w1, b1, w2, b2, *, tm=None, th=None,
               compute_dtype=None, approx_gelu=False):
    """x: [B, N, C_in]; w1: [C_in, H]; b1: [H]; w2: [H, C_out]; b2: [C_out].

    Weights are stored [in, out] (transposed from PyTorch nn.Linear's [out, in]).
    compute_dtype: optional dtype (e.g. jnp.bfloat16) for x/w1/w2 on the MXU;
    accumulation is always f32 and the output keeps x's original dtype.
    approx_gelu: use tanh-approx GELU (EUP) instead of exact erf.
    """
    B, N, C_in = x.shape
    H = w1.shape[1]
    C_out = w2.shape[1]
    out_dtype = x.dtype

    if compute_dtype is not None:
        x = x.astype(compute_dtype)
        w1 = w1.astype(compute_dtype)
        w2 = w2.astype(compute_dtype)

    in_isize = jnp.dtype(x.dtype).itemsize
    out_isize = jnp.dtype(out_dtype).itemsize
    # f32 output -> accumulate directly into the (resident) output block and
    # drop the scratch accumulator (saves tm*C_out*4 B of VMEM + a final copy).
    acc_in_out = jnp.dtype(out_dtype) == jnp.dtype(jnp.float32)

    M = B * N
    x2 = x.reshape(M, C_in)

    # Lane-dense channel dims (multiples of 128): unmasked loads/stores.
    C_in_pad = _round_up(C_in, 128)
    C_out_pad = _round_up(C_out, 128)
    if C_in_pad != C_in:
        x2 = jnp.pad(x2, ((0, 0), (0, C_in_pad - C_in)))
        w1 = jnp.pad(w1, ((0, C_in_pad - C_in), (0, 0)))
    if C_out_pad != C_out:
        w2 = jnp.pad(w2, ((0, 0), (0, C_out_pad - C_out)))
        b2 = jnp.pad(b2, ((0, C_out_pad - C_out),))

    budget = _vmem_budget_bytes()
    tm_target = tm if tm is not None else (1024 if in_isize <= 2 else 768)
    th_target = th if th is not None else 1024
    tm, th = _select_tiles(M, C_in_pad, _round_up(H, 128), C_out_pad,
                           in_isize, out_isize, acc_in_out, budget,
                           tm_target, th_target)

    M_pad = _round_up(M, tm)
    if M_pad != M:
        x2 = jnp.pad(x2, ((0, M_pad - M), (0, 0)))

    H_pad = _round_up(H, th)
    if H_pad != H:
        # Zero-padded hidden units: GELU(0)=0 and w2 pad rows are 0 -> no effect.
        w1 = jnp.pad(w1, ((0, 0), (0, H_pad - H)))
        b1 = jnp.pad(b1, ((0, H_pad - H),))
        w2 = jnp.pad(w2, ((0, H_pad - H), (0, 0)))

    b1_2d = b1.astype(jnp.float32).reshape(1, H_pad)
    b2_2d = b2.astype(jnp.float32).reshape(1, C_out_pad)

    grid = (M_pad // tm, H_pad // th)
    num_m_tiles = grid[0]

    cost = pl.CostEstimate(
        flops=2 * M_pad * (C_in_pad * H_pad + H_pad * C_out_pad),
        transcendentals=M_pad * H_pad,
        bytes_accessed=(x2.size * in_isize
                        # weights are re-streamed once per M tile:
                        + num_m_tiles * (w1.size + w2.size) * in_isize
                        + b1_2d.size * 4 + b2_2d.size * 4
                        + M_pad * C_out_pad * out_isize),
    )

    kernel = _make_mlp_kernel(acc_in_out, approx_gelu)
    scratch_shapes = ([] if acc_in_out
                      else [pltpu.VMEM((tm, C_out_pad), jnp.float32)])

    out2 = pl.pallas_call(
        kernel,
        out_shape=jax.ShapeDtypeStruct((M_pad, C_out_pad), out_dtype),
        grid_spec=pltpu.PrefetchScalarGridSpec(
            num_scalar_prefetch=0,
            grid=grid,
            in_specs=[
                pl.BlockSpec((tm, C_in_pad), lambda i, k: (i, 0)),   # x tile (resident over k)
                pl.BlockSpec((C_in_pad, th), lambda i, k: (0, k)),   # w1 hidden slice
                pl.BlockSpec((1, th), lambda i, k: (0, k)),          # b1 hidden slice
                pl.BlockSpec((th, C_out_pad), lambda i, k: (k, 0)),  # w2 hidden slice
                pl.BlockSpec((1, C_out_pad), lambda i, k: (0, 0)),   # b2 (tiny, resident)
            ],
            out_specs=pl.BlockSpec((tm, C_out_pad), lambda i, k: (i, 0)),
            scratch_shapes=scratch_shapes,
        ),
        compiler_params=pltpu.CompilerParams(
            dimension_semantics=("parallel", "arbitrary"),
            vmem_limit_bytes=budget),
        cost_estimate=cost,
    )(x2, w1, b1_2d, w2, b2_2d)

    return out2[:M, :C_out].reshape(B, N, C_out)


def mlp_ref(x, w1, b1, w2, b2, approx=False):
    h = jnp.einsum("bnc,ch->bnh", x, w1) + b1
    if approx:
        h = jax.nn.gelu(h, approximate=True)
    else:
        h = 0.5 * h * (1.0 + lax.erf(h * _INV_SQRT2))
    return jnp.einsum("bnh,hd->bnd", h, w2) + b2


if __name__ == "__main__":
    # Small shapes consistent with the module: tokens = B*N, channels = in_features.
    B, N = 2, 64
    in_features = 128
    hidden_features = 256
    out_features = in_features  # default in Mlp.__init__

    key = jax.random.PRNGKey(0)
    kx, k1, k2, k3, k4 = jax.random.split(key, 5)

    x = jax.random.normal(kx, (B, N, in_features), dtype=jnp.float32)
    # Deterministic "Linear"-style init (scaled uniform), stored as [in, out].
    bound1 = 1.0 / jnp.sqrt(in_features)
    w1 = jax.random.uniform(k1, (in_features, hidden_features),
                            minval=-bound1, maxval=bound1, dtype=jnp.float32)
    b1 = jax.random.uniform(k2, (hidden_features,),
                            minval=-bound1, maxval=bound1, dtype=jnp.float32)
    bound2 = 1.0 / jnp.sqrt(hidden_features)
    w2 = jax.random.uniform(k3, (hidden_features, out_features),
                            minval=-bound2, maxval=bound2, dtype=jnp.float32)
    b2 = jax.random.uniform(k4, (out_features,),
                            minval=-bound2, maxval=bound2, dtype=jnp.float32)

    ref = mlp_ref(x, w1, b1, w2, b2)

    # f32 path, exact GELU (matches the torch module exactly).
    out = jax.block_until_ready(mlp_pallas(x, w1, b1, w2, b2))
    assert out.shape == (B, N, out_features)
    assert jnp.allclose(out, ref, atol=1e-4, rtol=1e-4), "f32 mismatch vs reference"

    # bf16 MXU fast path (recommended on v5e/v6e/v7x): f32 accumulation, looser tol.
    out_bf16 = jax.block_until_ready(
        mlp_pallas(x, w1, b1, w2, b2, compute_dtype=jnp.bfloat16))
    assert out_bf16.shape == (B, N, out_features)
    assert jnp.allclose(out_bf16, ref, atol=5e-2, rtol=5e-2), "bf16 mismatch vs reference"

    # tanh-approx GELU path (EUP) vs matching approx reference.
    ref_tanh = mlp_ref(x, w1, b1, w2, b2, approx=True)
    out_tanh = jax.block_until_ready(
        mlp_pallas(x, w1, b1, w2, b2, approx_gelu=True))
    assert out_tanh.shape == (B, N, out_features)
    assert jnp.allclose(out_tanh, ref_tanh, atol=1e-3, rtol=1e-3), \
        "approx-GELU mismatch vs reference"

    print("KERNEL_OK")
</pallas_src>

<mosaic_0001>
module attributes {stable_mosaic.version = 11 : i64} {
  func.func @kernel(%arg0: i32, %arg1: i32, %arg2: memref<64x128xf32, #tpu.memory_space<vmem>>, %arg3: memref<128x256xf32, #tpu.memory_space<vmem>>, %arg4: memref<1x256xf32, #tpu.memory_space<vmem>>, %arg5: memref<256x128xf32, #tpu.memory_space<vmem>>, %arg6: memref<1x128xf32, #tpu.memory_space<vmem>>, %arg7: memref<64x128xf32, #tpu.memory_space<vmem>>) attributes {dimension_semantics = [#tpu.dimension_semantics<parallel>, #tpu.dimension_semantics<arbitrary>], iteration_bounds = array<i64: 2, 1>, scalar_prefetch = 0 : i64, scratch_operands = 0 : i64, tpu.core_type = #tpu.core_type<tc>, window_params = [{transform_indices = @transform_0, window_bounds = array<i64: 64, 128>}, {transform_indices = @transform_1, window_bounds = array<i64: 128, 256>}, {transform_indices = @transform_2, window_bounds = array<i64: 1, 256>}, {transform_indices = @transform_3, window_bounds = array<i64: 256, 128>}, {pipeline_mode = #tpu.pipeline_mode<synchronous>, transform_indices = @transform_4, window_bounds = array<i64: 1, 128>}, {transform_indices = @transform_5, window_bounds = array<i64: 64, 128>}]} {
    %c0_i32 = arith.constant 0 : i32
    %0 = arith.cmpi eq, %arg1, %c0_i32 : i32
    %1 = arith.extui %0 : i1 to i32
    %c0_i32_0 = arith.constant 0 : i32
    %2 = arith.cmpi ne, %1, %c0_i32_0 : i32
    scf.if %2 {
      %c0_16 = arith.constant 0 : index
      %c0_17 = arith.constant 0 : index
      %22 = vector.load %arg6[%c0_16, %c0_17] : memref<1x128xf32, #tpu.memory_space<vmem>>, vector<1x128xf32>
      %23 = vector.shape_cast %22 : vector<1x128xf32> to vector<1x128xf32>
      %24 = vector.broadcast %23 : vector<1x128xf32> to vector<64x128xf32>
      %c0_18 = arith.constant 0 : index
      %c0_19 = arith.constant 0 : index
      %25 = vector.load %arg7[%c0_18, %c0_19] : memref<64x128xf32, #tpu.memory_space<vmem>>, vector<64x128xf32>
      tpu.vector_store %arg7[%c0_18, %c0_19], %24 {strides = array<i32>} : memref<64x128xf32, #tpu.memory_space<vmem>>, vector<64x128xf32>,
    } else {
    }
    %c0 = arith.constant 0 : index
    %c0_1 = arith.constant 0 : index
    %3 = vector.load %arg2[%c0, %c0_1] : memref<64x128xf32, #tpu.memory_space<vmem>>, vector<64x128xf32>
    %c0_2 = arith.constant 0 : index
    %c0_3 = arith.constant 0 : index
    %4 = vector.load %arg3[%c0_2, %c0_3] : memref<128x256xf32, #tpu.memory_space<vmem>>, vector<128x256xf32>
    %cst = arith.constant dense<0.000000e+00> : vector<64x256xf32>
    %5 = tpu.matmul %3, %4, %cst {dimension_numbers = #tpu.dot_dimension_numbers<[1], [0], [0], [1], [0, 0, 1, 1], [], []>} : vector<64x128xf32>, vector<128x256xf32>, vector<64x256xf32> -> vector<64x256xf32>
    %c0_4 = arith.constant 0 : index
    %c0_5 = arith.constant 0 : index
    %6 = vector.load %arg4[%c0_4, %c0_5] : memref<1x256xf32, #tpu.memory_space<vmem>>, vector<1x256xf32>
    %7 = vector.broadcast %6 : vector<1x256xf32> to vector<64x256xf32>
    %8 = arith.addf %5, %7 : vector<64x256xf32>
    %cst_6 = arith.constant 5.000000e-01 : f32
    %9 = vector.broadcast %cst_6 : f32 to vector<64x256xf32>
    %10 = arith.mulf %9, %8 : vector<64x256xf32>
    %cst_7 = arith.constant 0.707106769 : f32
    %11 = vector.broadcast %cst_7 : f32 to vector<64x256xf32>
    %12 = arith.mulf %8, %11 : vector<64x256xf32>
    %13 = math.erf %12 : vector<64x256xf32>
    %cst_8 = arith.constant 1.000000e+00 : f32
    %14 = vector.broadcast %cst_8 : f32 to vector<64x256xf32>
    %15 = arith.addf %14, %13 : vector<64x256xf32>
    %16 = arith.mulf %10, %15 : vector<64x256xf32>
    %c0_9 = arith.constant 0 : index
    %c0_10 = arith.constant 0 : index
    %17 = vector.load %arg7[%c0_9, %c0_10] : memref<64x128xf32, #tpu.memory_space<vmem>>, vector<64x128xf32>
    %c0_11 = arith.constant 0 : index
    %c0_12 = arith.constant 0 : index
    %18 = vector.load %arg5[%c0_11, %c0_12] : memref<256x128xf32, #tpu.memory_space<vmem>>, vector<256x128xf32>
    %cst_13 = arith.constant dense<0.000000e+00> : vector<64x128xf32>
    %19 = tpu.matmul %16, %18, %cst_13 {dimension_numbers = #tpu.dot_dimension_numbers<[1], [0], [0], [1], [0, 0, 1, 1], [], []>} : vector<64x256xf32>, vector<256x128xf32>, vector<64x128xf32> -> vector<64x128xf32>
    %20 = arith.addf %17, %19 : vector<64x128xf32>
    %c0_14 = arith.constant 0 : index
    %c0_15 = arith.constant 0 : index
    %21 = vector.load %arg7[%c0_14, %c0_15] : memref<64x128xf32, #tpu.memory_space<vmem>>, vector<64x128xf32>
    tpu.vector_store %arg7[%c0_14, %c0_15], %20 {strides = array<i32>} : memref<64x128xf32, #tpu.memory_space<vmem>>, vector<64x128xf32>,
    return
  }
  func.func @transform_0(%arg0: i32, %arg1: i32) -> (i32, i32) {
    %c0_i32 = arith.constant 0 : i32
    %c0_i32_0 = arith.constant 0 : i32
    return %arg0, %c0_i32 : i32, i32
  }
  func.func @transform_1(%arg0: i32, %arg1: i32) -> (i32, i32) {
    %c0_i32 = arith.constant 0 : i32
    %c0_i32_0 = arith.constant 0 : i32
    return %c0_i32, %arg1 : i32, i32
  }
  func.func @transform_2(%arg0: i32, %arg1: i32) -> (i32, i32) {
    %c0_i32 = arith.constant 0 : i32
    %c0_i32_0 = arith.constant 0 : i32
    return %c0_i32, %arg1 : i32, i32
  }
  func.func @transform_3(%arg0: i32, %arg1: i32) -> (i32, i32) {
    %c0_i32 = arith.constant 0 : i32
    %c0_i32_0 = arith.constant 0 : i32
    return %arg1, %c0_i32 : i32, i32
  }
  func.func @transform_4(%arg0: i32, %arg1: i32) -> (i32, i32) {
    %c0_i32 = arith.constant 0 : i32
    %c0_i32_0 = arith.constant 0 : i32
    %c0_i32_1 = arith.constant 0 : i32
    return %c0_i32, %c0_i32_0 : i32, i32
  }
  func.func @transform_5(%arg0: i32, %arg1: i32) -> (i32, i32) {
    %c0_i32 = arith.constant 0 : i32
    %c0_i32_0 = arith.constant 0 : i32
    return %arg0, %c0_i32 : i32, i32
  }
}

</mosaic_0001>

<llo_original>
// kernel: tpu_custom_call.1
$region0: #{tpu_custom_call.1}
  #allocation0 [shape = 'u32[]', space=smem, size = 0x4, offset = 0x4, fixed_abs, tag = 'smem constant byte address 0x4 - core index']
  #allocation1 [shape = 'u32[144,128]{1,0:T(1,128)}', space=vmem, size = 0x12000, scoped, tag = 'internal scratch']
  %s0 = inlined_call_operand.hbm [shape: f32[128,128], index: 0, kind: input, shape index: {}]
  %s1 = inlined_call_operand.hbm [shape: f32[128,256], index: 1, kind: input, shape index: {}]
  %s2 = inlined_call_operand.vmem [shape: f32[1,256], index: 2, kind: input, shape index: {}]
  %s3 = inlined_call_operand.hbm [shape: f32[256,128], index: 3, kind: input, shape index: {}]
  %s4 = inlined_call_operand.vmem [shape: f32[1,128], index: 4, kind: input, shape index: {}]
  %s5 = inlined_call_operand.hbm [shape: f32[128,128], index: 5, kind: output, shape index: {}]
  %s6 = sld [smem:[#allocation0]]
  $region69: #{tpu_custom_call.1} parent=0
    _
  %s8 = ssub.s32 1, %s6
  %s9 = scalar_select 0, %s8, %s6
  $region1: #{tpu_custom_call.1} parent=0
    #allocation2 [shape = 'u8[65536]{0}', space=vmem, size = 0x10000, scoped, tag = 'input window, operand 0']
    #allocation3 [shape = 's32[2]{0}', space=sflag, size = 0x8, scoped, tag = 'scoped memory for tpu_custom_call.1']
    #allocation4 [shape = 's32[2]{0}', space=sflag, size = 0x8, scoped, tag = 'scoped memory for tpu_custom_call.1']
    #allocation5 [shape = 'u8[131072]{0}', space=vmem, size = 0x20000, scoped, tag = 'input window, operand 1, single buffered']
    #allocation6 [shape = 's32[1]{0}', space=sflag, size = 0x4, scoped, tag = 'scoped memory for tpu_custom_call.1']
    #allocation7 [shape = 'u8[131072]{0}', space=vmem, size = 0x20000, scoped, tag = 'input window, operand 3, single buffered']
    #allocation8 [shape = 'u8[65536]{0}', space=vmem, size = 0x10000, scoped, tag = 'output window, operand 0']
    %10 = vsyncpa [#allocation3], 0
    %s11 = scalar_lea.sflag [#allocation3], 1
    %12 = vsyncpa %s11, 0
    %13 = vsyncpa [#allocation6], 0
    %14 = vsyncpa [#allocation4], 0
    %s15 = scalar_lea.sflag [#allocation4], 1
    %16 = vsyncpa %s15, 0
    loop: start=0, step=1, limit=4
    $region2: #{tpu_custom_call.1} parent=1 // loop_pre_header
      _
    $region3: #{tpu_custom_call.1} parent=1 // loop_header
      %s18 = sphi 0, %s22
      %p19 = scmp.ge.s32.totalorder %s18, 4
      %s25 = sphi 0, %s37
      %s26 = sphi 0, %s33
      %s27 = sphi 0, %s25
      %s28 = sphi 0, %s26
      %s29 = sphi 0, %s27
      %s30 = sphi 0, %s28
      %s40 = sphi 0, %s42
      %s43 = sphi 0, %s40
      %s44 = sphi 0, %s43
      %s60 = sphi 0, %s44
      %s66 = sphi 0, %s68
      %s69 = sphi 0, %s66
      %s70 = sphi 0, %s69
      %s86 = sphi 0, %s70
      %s92 = sphi 0, %s94
      %s95 = sphi 0, %s92
      %s96 = sphi 0, %s95
      %s112 = sphi 0, %s96
      %s118 = sphi 0, %s120
      %s121 = sphi 0, %s118
      %s122 = sphi 0, %s121
      %s138 = sphi 0, %s122
      %s142 = sphi 0, %s142
      %s144 = sphi 0, %s142
      %s145 = sphi 0, %s144
      %s159 = sphi 0, %s145
      %s165 = sphi 0, %s167
      %s168 = sphi 0, %s165
      %s169 = sphi 0, %s168
      %s185 = sphi 0, %s169
    $region4: #{tpu_custom_call.1} parent=1 // loop_header_branch
      %21 = sbr.rel (%p19) target = $region8
    $region5: #{tpu_custom_call.1} parent=1 // loop_body
      %s23 = ssub.s32 %s18, 1
      %s24 = ssub.s32 %s18, 2
      %s31 = sadd.s32 1, %s26
      %p32 = scmp.ge.s32.totalorder %s31, 1
      %s33 = scalar_select %p32, 0, %s31
      %s34 = sadd.s32 1, %s25
      %s35 = scalar_select %p32, %s34, %s25
      %p36 = scmp.ge.s32.totalorder %s35, 2
      %s37 = scalar_select %p36, 0, %s35
      %s38 = ssub.s32 %s25, %s37
      %p39 = scmp.eq.s32.totalorder %s38, 0
      %s41 = sadd.s32 %s40, 1
      %s42 = scalar_select %p39, %s40, %s41
      %p45 = pneg %p39
      %p46 = scmp.eq.s32.totalorder %s18, 1
      %p47 = por %p45, %p46
      %p48 = scmp.ne.s32.totalorder %s40, %s43
      %p49 = scmp.eq.s32.totalorder %s18, 0
      %p50 = por %p48, %p49
      %p51 = scmp.ne.s32.totalorder %s40, %s43
      %p52 = scmp.eq.s32.totalorder %s23, 1
      %p53 = por %p51, %p52
      %p54 = scmp.ne.s32.totalorder %s43, %s44
      %p55 = scmp.eq.s32.totalorder %s23, 0
      %p56 = por %p54, %p55
      %p57 = scmp.ne.s32.totalorder %s43, %s44
      %p58 = scmp.eq.s32.totalorder %s24, 1
      %p59 = por %p57, %p58
      %p61 = scmp.ne.s32.totalorder %s44, %s60
      %p62 = scmp.eq.s32.totalorder %s24, 0
      %p63 = por %p61, %p62
      %s64 = ssub.s32 %s26, %s33
      %p65 = scmp.eq.s32.totalorder %s64, 0
      %s67 = sadd.s32 %s66, 1
      %s68 = scalar_select %p65, %s66, %s67
      %p71 = pneg %p65
      %p72 = scmp.eq.s32.totalorder %s18, 1
      %p73 = por %p71, %p72
      %p74 = scmp.ne.s32.totalorder %s66, %s69
      %p75 = scmp.eq.s32.totalorder %s18, 0
      %p76 = por %p74, %p75
      %p77 = scmp.ne.s32.totalorder %s66, %s69
      %p78 = scmp.eq.s32.totalorder %s23, 1
      %p79 = por %p77, %p78
      %p80 = scmp.ne.s32.totalorder %s69, %s70
      %p81 = scmp.eq.s32.totalorder %s23, 0
      %p82 = por %p80, %p81
      %p83 = scmp.ne.s32.totalorder %s69, %s70
      %p84 = scmp.eq.s32.totalorder %s24, 1
      %p85 = por %p83, %p84
      %p87 = scmp.ne.s32.totalorder %s70, %s86
      %p88 = scmp.eq.s32.totalorder %s24, 0
      %p89 = por %p87, %p88
      %s90 = ssub.s32 %s26, %s33
      %p91 = scmp.eq.s32.totalorder %s90, 0
      %s93 = sadd.s32 %s92, 1
      %s94 = scalar_select %p91, %s92, %s93
      %p97 = pneg %p91
      %p98 = scmp.eq.s32.totalorder %s18, 1
      %p99 = por %p97, %p98
      %p100 = scmp.ne.s32.totalorder %s92, %s95
      %p101 = scmp.eq.s32.totalorder %s18, 0
      %p102 = por %p100, %p101
      %p103 = scmp.ne.s32.totalorder %s92, %s95
      %p104 = scmp.eq.s32.totalorder %s23, 1
      %p105 = por %p103, %p104
      %p106 = scmp.ne.s32.totalorder %s95, %s96
      %p107 = scmp.eq.s32.totalorder %s23, 0
      %p108 = por %p106, %p107
      %p109 = scmp.ne.s32.totalorder %s95, %s96
      %p110 = scmp.eq.s32.totalorder %s24, 1
      %p111 = por %p109, %p110
      %p113 = scmp.ne.s32.totalorder %s96, %s112
      %p114 = scmp.eq.s32.totalorder %s24, 0
      %p115 = por %p113, %p114
      %s116 = ssub.s32 %s26, %s33
      %p117 = scmp.eq.s32.totalorder %s116, 0
      %s119 = sadd.s32 %s118, 1
      %s120 = scalar_select %p117, %s118, %s119
      %p123 = pneg %p117
      %p124 = scmp.eq.s32.totalorder %s18, 1
      %p125 = por %p123, %p124
      %p126 = scmp.ne.s32.totalorder %s118, %s121
      %p127 = scmp.eq.s32.totalorder %s18, 0
      %p128 = por %p126, %p127
      %p129 = scmp.ne.s32.totalorder %s118, %s121
      %p130 = scmp.eq.s32.totalorder %s23, 1
      %p131 = por %p129, %p130
      %p132 = scmp.ne.s32.totalorder %s121, %s122
      %p133 = scmp.eq.s32.totalorder %s23, 0
      %p134 = por %p132, %p133
      %p135 = scmp.ne.s32.totalorder %s121, %s122
      %p136 = scmp.eq.s32.totalorder %s24, 1
      %p137 = por %p135, %p136
      %p139 = scmp.ne.s32.totalorder %s122, %s138
      %p140 = scmp.eq.s32.totalorder %s24, 0
      %p141 = por %p139, %p140
      %s143 = sadd.s32 %s142, 1
      %p146 = scmp.eq.s32.totalorder %s18, 1
      %p147 = scmp.ne.s32.totalorder %s142, %s144
      %p148 = scmp.eq.s32.totalorder %s18, 0
      %p149 = por %p147, %p148
      %p150 = scmp.ne.s32.totalorder %s142, %s144
      %p151 = scmp.eq.s32.totalorder %s23, 1
      %p152 = por %p150, %p151
      %p153 = scmp.ne.s32.totalorder %s144, %s145
      %p154 = scmp.eq.s32.totalorder %s23, 0
      %p155 = por %p153, %p154
      %p156 = scmp.ne.s32.totalorder %s144, %s145
      %p157 = scmp.eq.s32.totalorder %s24, 1
      %p158 = por %p156, %p157
      %p160 = scmp.ne.s32.totalorder %s145, %s159
      %p161 = scmp.eq.s32.totalorder %s24, 0
      %p162 = por %p160, %p161
      %s163 = ssub.s32 %s25, %s37
      %p164 = scmp.eq.s32.totalorder %s163, 0
      %s166 = sadd.s32 %s165, 1
      %s167 = scalar_select %p164, %s165, %s166
      %p170 = pneg %p164
      %p171 = scmp.eq.s32.totalorder %s18, 1
      %p172 = por %p170, %p171
      %p173 = scmp.ne.s32.totalorder %s165, %s168
      %p174 = scmp.eq.s32.totalorder %s18, 0
      %p175 = por %p173, %p174
      %p176 = scmp.ne.s32.totalorder %s165, %s168
      %p177 = scmp.eq.s32.totalorder %s23, 1
      %p178 = por %p176, %p177
      %p179 = scmp.ne.s32.totalorder %s168, %s169
      %p180 = scmp.eq.s32.totalorder %s23, 0
      %p181 = por %p179, %p180
      %p182 = scmp.ne.s32.totalorder %s168, %s169
      %p183 = scmp.eq.s32.totalorder %s24, 1
      %p184 = por %p182, %p183
      %p186 = scmp.ne.s32.totalorder %s169, %s185
      %p187 = scmp.eq.s32.totalorder %s24, 0
      %p188 = por %p186, %p187
      %p189 = scmp.le.s32.totalorder 1, %s18
      %p190 = scmp.lt.s32.totalorder %s18, 3
      %p191 = pnand %p189, %p190
      %p192 = pneg %p191
      // Predicated region
      $region9: #{tpu_custom_call.1} parent=5 // pred_check
        _
      $region10: #{tpu_custom_call.1} parent=5 // pred_check_branch
        %194 = sbr.rel (%p191) target = $region12
      $region11: #{tpu_custom_call.1} parent=5 // pred_region
        %s195 = ssub.s32 %s18, 1
        // Predicated region
        $region13: #{tpu_custom_call.1} parent=11 // pred_check
          %p196 = pneg %p82
        $region14: #{tpu_custom_call.1} parent=11 // pred_check_branch
          %198 = sbr.rel (%p196) target = $region16
        $region15: #{tpu_custom_call.1} parent=11 // pred_region
          %s199 = smul.u32 2, %s28
          %s201 = ssub.s32 4096, 4096
          %202 = vsyncadd [#allocation6], %s201
          %s203 = smul.addr %s199, 128
          %s204 = scalar_lea.hbm %s1, %s203
          %s205 = sshll.u32 [#allocation5], 4
          %s206 = int_to_ptr.vmem [resolvable:$true] %s205
          %211 = dma.hbm_to_vmem [thread:$0]  %s204, 4096, %s206, [#allocation6], 256, 256, 16
        $region16: #{tpu_custom_call.1} parent=11 // pred_fallthru
          _
        // Predicated region
        $region17: #{tpu_custom_call.1} parent=11 // pred_check
          %p212 = pneg %p108
        $region18: #{tpu_custom_call.1} parent=11 // pred_check_branch
          %214 = sbr.rel (%p212) target = $region20
        $region19: #{tpu_custom_call.1} parent=11 // pred_region
          %s215 = smul.u32 2, %s28
          %p216 = scmp.lt.s32.totalorder %s215, 1
          %s217 = scalar_select %p216, %s215, 1
          %s218 = scalar_lea.vmem %s2, %s217
          %s219 = smul.u32 2, %s28
        $region20: #{tpu_custom_call.1} parent=11 // pred_fallthru
          _
        // Predicated region
        $region21: #{tpu_custom_call.1} parent=11 // pred_check
          %p220 = pneg %p134
        $region22: #{tpu_custom_call.1} parent=11 // pred_check_branch
          %222 = sbr.rel (%p220) target = $region24
        $region23: #{tpu_custom_call.1} parent=11 // pred_region
          %s223 = smul.u32 32, %s28
          %s225 = ssub.s32 4096, 4096
          %226 = vsyncadd [#allocation6], %s225
          %s227 = smul.addr %s223, 128
          %s228 = scalar_lea.hbm %s3, %s227
          %s229 = sshll.u32 [#allocation7], 4
          %s230 = int_to_ptr.vmem [resolvable:$true] %s229
          %235 = dma.hbm_to_vmem [thread:$0]  %s228, 4096, %s230, [#allocation6], 128, 128, 8
        $region24: #{tpu_custom_call.1} parent=11 // pred_fallthru
          _
        // Predicated region
        $region25: #{tpu_custom_call.1} parent=11 // pred_check
          %p236 = pneg %p155
        $region26: #{tpu_custom_call.1} parent=11 // pred_check_branch
          %238 = sbr.rel (%p236) target = $region28
        $region27: #{tpu_custom_call.1} parent=11 // pred_region
          _
        $region28: #{tpu_custom_call.1} parent=11 // pred_fallthru
          _
      $region12: #{tpu_custom_call.1} parent=5 // pred_fallthru
        _
      %p239 = scmp.lt.s32.totalorder %s18, 2
      // Predicated region
      $region29: #{tpu_custom_call.1} parent=5 // pred_check
        %p240 = pneg %p239
      $region30: #{tpu_custom_call.1} parent=5 // pred_check_branch
        %242 = sbr.rel (%p240) target = $region32
      $region31: #{tpu_custom_call.1} parent=5 // pred_region
        // Predicated region
        $region33: #{tpu_custom_call.1} parent=31 // pred_check
          %p243 = pneg %p50
        $region34: #{tpu_custom_call.1} parent=31 // pred_check_branch
          %245 = sbr.rel (%p243) target = $region36
        $region35: #{tpu_custom_call.1} parent=31 // pred_region
          %s246 = sand.u32 %s40, 1
          %s247 = scalar_lea.sflag [#allocation3], %s246
          %s248 = sand.u32 %s40, 1
          %s249 = smul.addr %s248, 64
          %s250 = scalar_lea.vmem [#allocation2], %s249
          %s251 = smul.u32 8, %s25
          %s253 = ssub.s32 1024, 1024
          %254 = vsyncadd %s247, %s253
          %s255 = smul.addr %s251, 128
          %s256 = scalar_lea.hbm %s0, %s255
          %s257 = sshll.u32 %s250, 4
          %s258 = int_to_ptr.vmem [resolvable:$true] %s257
          %263 = dma.hbm_to_vmem [thread:$0]  %s256, 1024, %s258, %s247, 128, 128, 8
        $region36: #{tpu_custom_call.1} parent=31 // pred_fallthru
          _
      $region32: #{tpu_custom_call.1} parent=5 // pred_fallthru
        _
      %p264 = scmp.le.s32.totalorder 1, %s18
      %p265 = scmp.lt.s32.totalorder %s18, 3
      %p266 = pnand %p264, %p265
      %p267 = pneg %p266
      // Predicated region
      $region37: #{tpu_custom_call.1} parent=5 // pred_check
        _
      $region38: #{tpu_custom_call.1} parent=5 // pred_check_branch
        %269 = sbr.rel (%p266) target = $region40
      $region39: #{tpu_custom_call.1} parent=5 // pred_region
        %s270 = ssub.s32 %s18, 1
        %s271 = sand.u32 %s43, 1
        %s272 = scalar_lea.sflag [#allocation3], %s271
        %s273 = sand.u32 %s43, 1
        %s274 = smul.addr %s273, 64
        %s275 = scalar_lea.vmem [#allocation2], %s274
        // Predicated region
        $region41: #{tpu_custom_call.1} parent=39 // pred_check
          %p276 = pneg %p56
        $region42: #{tpu_custom_call.1} parent=39 // pred_check_branch
          %278 = sbr.rel (%p276) target = $region44
        $region43: #{tpu_custom_call.1} parent=39 // pred_region
          %279 = dma.done %s272, 1024
        $region44: #{tpu_custom_call.1} parent=39 // pred_fallthru
          _
        // Predicated region
        $region45: #{tpu_custom_call.1} parent=39 // pred_check
          %p280 = pneg %p82
        $region46: #{tpu_custom_call.1} parent=39 // pred_check_branch
          %282 = sbr.rel (%p280) target = $region48
        $region47: #{tpu_custom_call.1} parent=39 // pred_region
          %283 = dma.done [#allocation6], 4096
        $region48: #{tpu_custom_call.1} parent=39 // pred_fallthru
          _
        // Predicated region
        $region49: #{tpu_custom_call.1} parent=39 // pred_check
          %p284 = pneg %p134
        $region50: #{tpu_custom_call.1} parent=39 // pred_check_branch
          %286 = sbr.rel (%p284) target = $region52
        $region51: #{tpu_custom_call.1} parent=39 // pred_region
          %287 = dma.done [#allocation6], 4096
        $region52: #{tpu_custom_call.1} parent=39 // pred_fallthru
          _
        %s288 = sand.u32 %s43, 1
        %s289 = scalar_lea.sflag [#allocation3], %s288
        %s290 = sand.u32 %s43, 1
        %s291 = smul.addr %s290, 64
        %s292 = scalar_lea.vmem [#allocation2], %s291
        %p293 = pneg %p56
        %p294 = pneg %p53
        %p295 = pneg %p82
        %p296 = pneg %p79
        %s297 = smul.u32 2, %s28
        %p298 = scmp.lt.s32.totalorder %s297, 1
        %s299 = scalar_select %p298, %s297, 1
        %s300 = scalar_lea.vmem %s2, %s299
        %p301 = pneg %p108
        %p302 = pneg %p105
        %p303 = pneg %p134
        %p304 = pneg %p131
        %p305 = pneg %p155
        %p306 = pneg %p152
        %p307 = pneg %p181
        %p308 = pneg %p178
        %s309 = sand.u32 %s168, 1
        %s310 = scalar_lea.sflag [#allocation4], %s309
        %s311 = sand.u32 %s168, 1
        %s312 = smul.addr %s311, 64
        %s313 = scalar_lea.vmem [#allocation8], %s312
        %s314 = smul.u32 8, %s27
        %s315 = smul.u32 2, %s28
        %s316 = smul.u32 2, %s28
        %p317 = scmp.lt.s32.totalorder %s316, 1
        %s318 = scalar_select %p317, %s316, 1
        %s319 = scalar_lea.vmem %s2, %s318
        %s320 = smul.u32 2, %s28
        %s321 = smul.u32 32, %s28
        %s322 = smul.u32 8, %s27
        %p323 = scmp.eq.s32.totalorder %s28, 0
        // Predicated region
        $region53: #{tpu_custom_call.1} parent=39 // pred_check
          %p324 = pneg %p323
        $region54: #{tpu_custom_call.1} parent=39 // pred_check_branch
          %326 = sbr.rel (%p324) target = $region56
        $region55: #{tpu_custom_call.1} parent=39 // pred_region
          %v327 = vld [vmem:[%s4] sm:$0x1]
          %v329 = vlaneseq
          %v330 = vshrl.u32 %v329, 7
          %v331 = vsub.s32 0, %v330
          %v332 = vrot.slane %v327, %v331
          %334 = vst [vmem:[%s313] sm:$0xff] %v332
          %335 = vst [vmem:[%s313 + $0x8] sm:$0xff] %v332
          %336 = vst [vmem:[%s313 + $0x10] sm:$0xff] %v332
          %337 = vst [vmem:[%s313 + $0x18] sm:$0xff] %v332
          %338 = vst [vmem:[%s313 + $0x20] sm:$0xff] %v332
          %339 = vst [vmem:[%s313 + $0x28] sm:$0xff] %v332
          %340 = vst [vmem:[%s313 + $0x30] sm:$0xff] %v332
          %341 = vst [vmem:[%s313 + $0x38] sm:$0xff] %v332
        $region56: #{tpu_custom_call.1} parent=39 // pred_fallthru
          _
        %v342 = vld [vmem:[%s275] sm:$0xff]
        %v343 = vld [vmem:[%s275 + $0x8] sm:$0xff]
        %v344 = vld [vmem:[%s275 + $0x10] sm:$0xff]
        %v345 = vld [vmem:[%s275 + $0x18] sm:$0xff]
        %v346 = vld [vmem:[%s275 + $0x20] sm:$0xff]
        %v347 = vld [vmem:[%s275 + $0x28] sm:$0xff]
        %v348 = vld [vmem:[%s275 + $0x30] sm:$0xff]
        %v349 = vld [vmem:[%s275 + $0x38] sm:$0xff]
        %v350 = vld [vmem:[#allocation5] sm:$0xff]
        %v351 = vld [vmem:[#allocation5 + $0x8] sm:$0xff]
        %v352 = vld [vmem:[#allocation5 + $0x10] sm:$0xff]
        %v353 = vld [vmem:[#allocation5 + $0x18] sm:$0xff]
        %v354 = vld [vmem:[#allocation5 + $0x20] sm:$0xff]
        %v355 = vld [vmem:[#allocation5 + $0x28] sm:$0xff]
        %v356 = vld [vmem:[#allocation5 + $0x30] sm:$0xff]
        %v357 = vld [vmem:[#allocation5 + $0x38] sm:$0xff]
        %v358 = vld [vmem:[#allocation5 + $0x40] sm:$0xff]
        %v359 = vld [vmem:[#allocation5 + $0x48] sm:$0xff]
        %v360 = vld [vmem:[#allocation5 + $0x50] sm:$0xff]
        %v361 = vld [vmem:[#allocation5 + $0x58] sm:$0xff]
        %v362 = vld [vmem:[#allocation5 + $0x60] sm:$0xff]
        %v363 = vld [vmem:[#allocation5 + $0x68] sm:$0xff]
        %v364 = vld [vmem:[#allocation5 + $0x70] sm:$0xff]
        %v365 = vld [vmem:[#allocation5 + $0x78] sm:$0xff]
        %v366 = vld [vmem:[#allocation5 + $0x80] sm:$0xff]
        %v367 = vld [vmem:[#allocation5 + $0x88] sm:$0xff]
        %v368 = vld [vmem:[#allocation5 + $0x90] sm:$0xff]
        %v369 = vld [vmem:[#allocation5 + $0x98] sm:$0xff]
        %v370 = vld [vmem:[#allocation5 + $0xa0] sm:$0xff]
        %v371 = vld [vmem:[#allocation5 + $0xa8] sm:$0xff]
        %v372 = vld [vmem:[#allocation5 + $0xb0] sm:$0xff]
        %v373 = vld [vmem:[#allocation5 + $0xb8] sm:$0xff]
        %v374 = vld [vmem:[#allocation5 + $0xc0] sm:$0xff]
        %v375 = vld [vmem:[#allocation5 + $0xc8] sm:$0xff]
        %v376 = vld [vmem:[#allocation5 + $0xd0] sm:$0xff]
        %v377 = vld [vmem:[#allocation5 + $0xd8] sm:$0xff]
        %v378 = vld [vmem:[#allocation5 + $0xe0] sm:$0xff]
        %v379 = vld [vmem:[#allocation5 + $0xe8] sm:$0xff]
        %v380 = vld [vmem:[#allocation5 + $0xf0] sm:$0xff]
        %v381 = vld [vmem:[#allocation5 + $0xf8] sm:$0xff]
        %v382 = vld [vmem:[%s319] sm:$0x3]
        %v384 = vlaneseq
        %v385 = vshrl.u32 %v384, 7
        %v386 = vsub.s32 0, %v385
        %v387 = vrot.slane %v382, %v386
        %v388 = vlaneseq
        %v389 = vshrl.u32 %v388, 7
        %v390 = vsub.s32 1, %v389
        %v391 = vrot.slane %v382, %v390
        %394 = vmatprep.subr.mxu0 %v351
        %395 = vmatpush1.msra.mxu0 %v350
        %396 = vmatprep.subr.mxu0 %v353
        %397 = vmatpush1.msra.mxu0 %v352
        %398 = vmatprep.subr.mxu0 %v355
        %399 = vmatpush1.msra.mxu0 %v354
        %400 = vmatprep.subr.mxu0 %v357
        %401 = vmatpush1.msra.mxu0 %v356
        %402 = vmatprep.subr.mxu0 %v359
        %403 = vmatpush1.msra.mxu0 %v358
        %404 = vmatprep.subr.mxu0 %v361
        %405 = vmatpush1.msra.mxu0 %v360
        %406 = vmatprep.subr.mxu0 %v363
        %407 = vmatpush1.msra.mxu0 %v362
        %408 = vmatprep.subr.mxu0 %v365
        %409 = vmatpush1.msra.mxu0 %v364
        %410 = vmatprep.subr.mxu0 %v367
        %411 = vmatpush1.msra.mxu0 %v366
        %412 = vmatprep.subr.mxu0 %v369
        %413 = vmatpush1.msra.mxu0 %v368
        %414 = vmatprep.subr.mxu0 %v371
        %415 = vmatpush1.msra.mxu0 %v370
        %416 = vmatprep.subr.mxu0 %v373
        %417 = vmatpush1.msra.mxu0 %v372
        %418 = vmatprep.subr.mxu0 %v375
        %419 = vmatpush1.msra.mxu0 %v374
        %420 = vmatprep.subr.mxu0 %v377
        %421 = vmatpush1.msra.mxu0 %v376
        %422 = vmatprep.subr.mxu0 %v379
        %423 = vmatpush1.msra.mxu0 %v378
        %424 = vmatprep.subr.mxu0 %v381
        %425 = vmatpush1.msra.mxu0 %v380
        %426 = vmatprep.subr.mxu0 0.0
        %427 = vmatpush1.msra.mxu0 0.0
        %428 = vmatprep.subr.mxu0 0.0
        %429 = vmatpush1.msra.mxu0 0.0
        %430 = vmatprep.subr.mxu0 0.0
        %431 = vmatpush1.msra.mxu0 0.0
        %432 = vmatprep.subr.mxu0 0.0
        %433 = vmatpush1.msra.mxu0 0.0
        %434 = vmatprep.subr.mxu0 0.0
        %435 = vmatpush1.msra.mxu0 0.0
        %436 = vmatprep.subr.mxu0 0.0
        %437 = vmatpush1.msra.mxu0 0.0
        %438 = vmatprep.subr.mxu0 0.0
        %439 = vmatpush1.msra.mxu0 0.0
        %440 = vmatprep.subr.mxu0 0.0
        %441 = vmatpush1.msra.mxu0 0.0
        %442 = vmatprep.subr.mxu0 0.0
        %443 = vmatpush1.msra.mxu0 0.0
        %444 = vmatprep.subr.mxu0 0.0
        %445 = vmatpush1.msra.mxu0 0.0
        %446 = vmatprep.subr.mxu0 0.0
        %447 = vmatpush1.msra.mxu0 0.0
        %448 = vmatprep.subr.mxu0 0.0
        %449 = vmatpush1.msra.mxu0 0.0
        %450 = vmatprep.subr.mxu0 0.0
        %451 = vmatpush1.msra.mxu0 0.0
        %452 = vmatprep.subr.mxu0 0.0
        %453 = vmatpush1.msra.mxu0 0.0
        %454 = vmatprep.subr.mxu0 0.0
        %455 = vmatpush1.msra.mxu0 0.0
        %456 = vmatprep.subr.mxu0 0.0
        %457 = vmatpush1.msra.mxu0 0.0
        %458 = vmatprep.mubr.f32.mxu0 0.0
        %459 = vmatmul.mubr.f32.gmra.mrb[0].mxu0 %v342
        %v460 = vpop.f32.mrb[0].mxu0
        %v461 = vadd.f32 %v387, %v460
        %v462 = vpop.f32.mrb[0].mxu0
        %v463 = vadd.f32 %v391, %v462
        %464 = vmatprep.mubr.f32.mxu0 0.0
        %465 = vmatmul.mubr.f32.gmra.mrb[0].mxu0 %v343
        %v466 = vpop.f32.mrb[0].mxu0
        %v467 = vadd.f32 %v387, %v466
        %v468 = vpop.f32.mrb[0].mxu0
        %v469 = vadd.f32 %v391, %v468
        %470 = vmatprep.mubr.f32.mxu0 0.0
        %471 = vmatmul.mubr.f32.gmra.mrb[0].mxu0 %v344
        %v472 = vpop.f32.mrb[0].mxu0
        %v473 = vadd.f32 %v387, %v472
        %v474 = vpop.f32.mrb[0].mxu0
        %v475 = vadd.f32 %v391, %v474
        %476 = vmatprep.mubr.f32.mxu0 0.0
        %477 = vmatmul.mubr.f32.gmra.mrb[0].mxu0 %v345
        %v478 = vpop.f32.mrb[0].mxu0
        %v479 = vadd.f32 %v387, %v478
        %v480 = vpop.f32.mrb[0].mxu0
        %v481 = vadd.f32 %v391, %v480
        %482 = vmatprep.mubr.f32.mxu0 0.0
        %483 = vmatmul.mubr.f32.gmra.mrb[0].mxu0 %v346
        %v484 = vpop.f32.mrb[0].mxu0
        %v485 = vadd.f32 %v387, %v484
        %v486 = vpop.f32.mrb[0].mxu0
        %v487 = vadd.f32 %v391, %v486
        %488 = vmatprep.mubr.f32.mxu0 0.0
        %489 = vmatmul.mubr.f32.gmra.mrb[0].mxu0 %v347
        %v490 = vpop.f32.mrb[0].mxu0
        %v491 = vadd.f32 %v387, %v490
        %v492 = vpop.f32.mrb[0].mxu0
        %v493 = vadd.f32 %v391, %v492
        %494 = vmatprep.mubr.f32.mxu0 0.0
        %495 = vmatmul.mubr.f32.gmra.mrb[0].mxu0 %v348
        %v496 = vpop.f32.mrb[0].mxu0
        %v497 = vadd.f32 %v387, %v496
        %v498 = vpop.f32.mrb[0].mxu0
        %v499 = vadd.f32 %v391, %v498
        %500 = vmatprep.mubr.f32.mxu0 0.0
        %501 = vmatmul.mubr.f32.gmra.mrb[0].mxu0 %v349
        %v502 = vpop.f32.mrb[0].mxu0
        %v503 = vadd.f32 %v387, %v502
        %v504 = vpop.f32.mrb[0].mxu0
        %v505 = vadd.f32 %v391, %v504
        %506 = vdwg.mxu0
        %v507 = vmul.f32 %v461, 0.5
        %v508 = vmul.f32 %v463, 0.5
        %v509 = vmul.f32 %v467, 0.5
        %v510 = vmul.f32 %v469, 0.5
        %v511 = vmul.f32 %v473, 0.5
        %v512 = vmul.f32 %v475, 0.5
        %v513 = vmul.f32 %v479, 0.5
        %v514 = vmul.f32 %v481, 0.5
        %v515 = vmul.f32 %v485, 0.5
        %v516 = vmul.f32 %v487, 0.5
        %v517 = vmul.f32 %v491, 0.5
        %v518 = vmul.f32 %v493, 0.5
        %v519 = vmul.f32 %v497, 0.5
        %v520 = vmul.f32 %v499, 0.5
        %v521 = vmul.f32 %v503, 0.5
        %v522 = vmul.f32 %v505, 0.5
        %v523 = vmul.f32 %v461, 0.70710677
        %v524 = vmul.f32 %v463, 0.70710677
        %v525 = vmul.f32 %v467, 0.70710677
        %v526 = vmul.f32 %v469, 0.70710677
        %v527 = vmul.f32 %v473, 0.70710677
        %v528 = vmul.f32 %v475, 0.70710677
        %v529 = vmul.f32 %v479, 0.70710677
        %v530 = vmul.f32 %v481, 0.70710677
        %v531 = vmul.f32 %v485, 0.70710677
        %v532 = vmul.f32 %v487, 0.70710677
        %v533 = vmul.f32 %v491, 0.70710677
        %v534 = vmul.f32 %v493, 0.70710677
        %v535 = vmul.f32 %v497, 0.70710677
        %v536 = vmul.f32 %v499, 0.70710677
        %v537 = vmul.f32 %v503, 0.70710677
        %v538 = vmul.f32 %v505, 0.70710677
        %v539 = verf.f32.pop %v523
        %v540 = verf.f32.pop %v524
        %v541 = verf.f32.pop %v525
        %v542 = verf.f32.pop %v526
        %v543 = verf.f32.pop %v527
        %v544 = verf.f32.pop %v528
        %v545 = verf.f32.pop %v529
        %v546 = verf.f32.pop %v530
        %v547 = verf.f32.pop %v531
        %v548 = verf.f32.pop %v532
        %v549 = verf.f32.pop %v533
        %v550 = verf.f32.pop %v534
        %v551 = verf.f32.pop %v535
        %v552 = verf.f32.pop %v536
        %v553 = verf.f32.pop %v537
        %v554 = verf.f32.pop %v538
        %v555 = vadd.f32 %v539, 1.0
        %v556 = vadd.f32 %v540, 1.0
        %v557 = vadd.f32 %v541, 1.0
        %v558 = vadd.f32 %v542, 1.0
        %v559 = vadd.f32 %v543, 1.0
        %v560 = vadd.f32 %v544, 1.0
        %v561 = vadd.f32 %v545, 1.0
        %v562 = vadd.f32 %v546, 1.0
        %v563 = vadd.f32 %v547, 1.0
        %v564 = vadd.f32 %v548, 1.0
        %v565 = vadd.f32 %v549, 1.0
        %v566 = vadd.f32 %v550, 1.0
        %v567 = vadd.f32 %v551, 1.0
        %v568 = vadd.f32 %v552, 1.0
        %v569 = vadd.f32 %v553, 1.0
        %v570 = vadd.f32 %v554, 1.0
        %v571 = vmul.f32 %v507, %v555
        %v572 = vmul.f32 %v508, %v556
        %v573 = vmul.f32 %v509, %v557
        %v574 = vmul.f32 %v510, %v558
        %v575 = vmul.f32 %v511, %v559
        %v576 = vmul.f32 %v512, %v560
        %v577 = vmul.f32 %v513, %v561
        %v578 = vmul.f32 %v514, %v562
        %v579 = vmul.f32 %v515, %v563
        %v580 = vmul.f32 %v516, %v564
        %v581 = vmul.f32 %v517, %v565
        %v582 = vmul.f32 %v518, %v566
        %v583 = vmul.f32 %v519, %v567
        %v584 = vmul.f32 %v520, %v568
        %v585 = vmul.f32 %v521, %v569
        %v586 = vmul.f32 %v522, %v570
        %v587 = vld [vmem:[%s313] sm:$0xff]
        %v588 = vld [vmem:[%s313 + $0x8] sm:$0xff]
        %v589 = vld [vmem:[%s313 + $0x10] sm:$0xff]
        %v590 = vld [vmem:[%s313 + $0x18] sm:$0xff]
        %v591 = vld [vmem:[%s313 + $0x20] sm:$0xff]
        %v592 = vld [vmem:[%s313 + $0x28] sm:$0xff]
        %v593 = vld [vmem:[%s313 + $0x30] sm:$0xff]
        %v594 = vld [vmem:[%s313 + $0x38] sm:$0xff]
        %v595 = vld [vmem:[#allocation7] sm:$0xff]
        %v596 = vld [vmem:[#allocation7 + $0x8] sm:$0xff]
        %v597 = vld [vmem:[#allocation7 + $0x10] sm:$0xff]
        %v598 = vld [vmem:[#allocation7 + $0x18] sm:$0xff]
        %v599 = vld [vmem:[#allocation7 + $0x20] sm:$0xff]
        %v600 = vld [vmem:[#allocation7 + $0x28] sm:$0xff]
        %v601 = vld [vmem:[#allocation7 + $0x30] sm:$0xff]
        %v602 = vld [vmem:[#allocation7 + $0x38] sm:$0xff]
        %v603 = vld [vmem:[#allocation7 + $0x40] sm:$0xff]
        %v604 = vld [vmem:[#allocation7 + $0x48] sm:$0xff]
        %v605 = vld [vmem:[#allocation7 + $0x50] sm:$0xff]
        %v606 = vld [vmem:[#allocation7 + $0x58] sm:$0xff]
        %v607 = vld [vmem:[#allocation7 + $0x60] sm:$0xff]
        %v608 = vld [vmem:[#allocation7 + $0x68] sm:$0xff]
        %v609 = vld [vmem:[#allocation7 + $0x70] sm:$0xff]
        %v610 = vld [vmem:[#allocation7 + $0x78] sm:$0xff]
        %v611 = vld [vmem:[#allocation7 + $0x80] sm:$0xff]
        %v612 = vld [vmem:[#allocation7 + $0x88] sm:$0xff]
        %v613 = vld [vmem:[#allocation7 + $0x90] sm:$0xff]
        %v614 = vld [vmem:[#allocation7 + $0x98] sm:$0xff]
        %v615 = vld [vmem:[#allocation7 + $0xa0] sm:$0xff]
        %v616 = vld [vmem:[#allocation7 + $0xa8] sm:$0xff]
        %v617 = vld [vmem:[#allocation7 + $0xb0] sm:$0xff]
        %v618 = vld [vmem:[#allocation7 + $0xb8] sm:$0xff]
        %v619 = vld [vmem:[#allocation7 + $0xc0] sm:$0xff]
        %v620 = vld [vmem:[#allocation7 + $0xc8] sm:$0xff]
        %v621 = vld [vmem:[#allocation7 + $0xd0] sm:$0xff]
        %v622 = vld [vmem:[#allocation7 + $0xd8] sm:$0xff]
        %v623 = vld [vmem:[#allocation7 + $0xe0] sm:$0xff]
        %v624 = vld [vmem:[#allocation7 + $0xe8] sm:$0xff]
        %v625 = vld [vmem:[#allocation7 + $0xf0] sm:$0xff]
        %v626 = vld [vmem:[#allocation7 + $0xf8] sm:$0xff]
        %627 = vmatprep.subr.mxu0 0.0
        %628 = vmatpush1.msra.mxu0 %v595
        %629 = vmatprep.subr.mxu0 0.0
        %630 = vmatpush1.msra.mxu0 %v596
        %631 = vmatprep.subr.mxu0 0.0
        %632 = vmatpush1.msra.mxu0 %v597
        %633 = vmatprep.subr.mxu0 0.0
        %634 = vmatpush1.msra.mxu0 %v598
        %635 = vmatprep.subr.mxu0 0.0
        %636 = vmatpush1.msra.mxu0 %v599
        %637 = vmatprep.subr.mxu0 0.0
        %638 = vmatpush1.msra.mxu0 %v600
        %639 = vmatprep.subr.mxu0 0.0
        %640 = vmatpush1.msra.mxu0 %v601
        %641 = vmatprep.subr.mxu0 0.0
        %642 = vmatpush1.msra.mxu0 %v602
        %643 = vmatprep.subr.mxu0 0.0
        %644 = vmatpush1.msra.mxu0 %v603
        %645 = vmatprep.subr.mxu0 0.0
        %646 = vmatpush1.msra.mxu0 %v604
        %647 = vmatprep.subr.mxu0 0.0
        %648 = vmatpush1.msra.mxu0 %v605
        %649 = vmatprep.subr.mxu0 0.0
        %650 = vmatpush1.msra.mxu0 %v606
        %651 = vmatprep.subr.mxu0 0.0
        %652 = vmatpush1.msra.mxu0 %v607
        %653 = vmatprep.subr.mxu0 0.0
        %654 = vmatpush1.msra.mxu0 %v608
        %655 = vmatprep.subr.mxu0 0.0
        %656 = vmatpush1.msra.mxu0 %v609
        %657 = vmatprep.subr.mxu0 0.0
        %658 = vmatpush1.msra.mxu0 %v610
        %659 = vmatprep.subr.mxu0 0.0
        %660 = vmatpush1.msra.mxu0 %v611
        %661 = vmatprep.subr.mxu0 0.0
        %662 = vmatpush1.msra.mxu0 %v612
        %663 = vmatprep.subr.mxu0 0.0
        %664 = vmatpush1.msra.mxu0 %v613
        %665 = vmatprep.subr.mxu0 0.0
        %666 = vmatpush1.msra.mxu0 %v614
        %667 = vmatprep.subr.mxu0 0.0
        %668 = vmatpush1.msra.mxu0 %v615
        %669 = vmatprep.subr.mxu0 0.0
        %670 = vmatpush1.msra.mxu0 %v616
        %671 = vmatprep.subr.mxu0 0.0
        %672 = vmatpush1.msra.mxu0 %v617
        %673 = vmatprep.subr.mxu0 0.0
        %674 = vmatpush1.msra.mxu0 %v618
        %675 = vmatprep.subr.mxu0 0.0
        %676 = vmatpush1.msra.mxu0 %v619
        %677 = vmatprep.subr.mxu0 0.0
        %678 = vmatpush1.msra.mxu0 %v620
        %679 = vmatprep.subr.mxu0 0.0
        %680 = vmatpush1.msra.mxu0 %v621
        %681 = vmatprep.subr.mxu0 0.0
        %682 = vmatpush1.msra.mxu0 %v622
        %683 = vmatprep.subr.mxu0 0.0
        %684 = vmatpush1.msra.mxu0 %v623
        %685 = vmatprep.subr.mxu0 0.0
        %686 = vmatpush1.msra.mxu0 %v624
        %687 = vmatprep.subr.mxu0 0.0
        %688 = vmatpush1.msra.mxu0 %v625
        %689 = vmatprep.subr.mxu0 0.0
        %690 = vmatpush1.msra.mxu0 %v626
        %691 = vmatprep.mubr.f32.mxu0 %v572
        %692 = vmatmul.mubr.f32.gmra.mrb[0].mxu0 %v571
        %v693 = vpop.f32.mrb[0].mxu0
        %v694 = vadd.f32 0.0, %v693
        %v695 = vpop.f32.mrb[0].mxu0
        %696 = vmatprep.mubr.f32.mxu0 %v574
        %697 = vmatmul.mubr.f32.gmra.mrb[0].mxu0 %v573
        %v698 = vpop.f32.mrb[0].mxu0
        %v699 = vadd.f32 0.0, %v698
        %v700 = vpop.f32.mrb[0].mxu0
        %701 = vmatprep.mubr.f32.mxu0 %v576
        %702 = vmatmul.mubr.f32.gmra.mrb[0].mxu0 %v575
        %v703 = vpop.f32.mrb[0].mxu0
        %v704 = vadd.f32 0.0, %v703
        %v705 = vpop.f32.mrb[0].mxu0
        %706 = vmatprep.mubr.f32.mxu0 %v578
        %707 = vmatmul.mubr.f32.gmra.mrb[0].mxu0 %v577
        %v708 = vpop.f32.mrb[0].mxu0
        %v709 = vadd.f32 0.0, %v708
        %v710 = vpop.f32.mrb[0].mxu0
        %711 = vmatprep.mubr.f32.mxu0 %v580
        %712 = vmatmul.mubr.f32.gmra.mrb[0].mxu0 %v579
        %v713 = vpop.f32.mrb[0].mxu0
        %v714 = vadd.f32 0.0, %v713
        %v715 = vpop.f32.mrb[0].mxu0
        %716 = vmatprep.mubr.f32.mxu0 %v582
        %717 = vmatmul.mubr.f32.gmra.mrb[0].mxu0 %v581
        %v718 = vpop.f32.mrb[0].mxu0
        %v719 = vadd.f32 0.0, %v718
        %v720 = vpop.f32.mrb[0].mxu0
        %721 = vmatprep.mubr.f32.mxu0 %v584
        %722 = vmatmul.mubr.f32.gmra.mrb[0].mxu0 %v583
        %v723 = vpop.f32.mrb[0].mxu0
        %v724 = vadd.f32 0.0, %v723
        %v725 = vpop.f32.mrb[0].mxu0
        %726 = vmatprep.mubr.f32.mxu0 %v586
        %727 = vmatmul.mubr.f32.gmra.mrb[0].mxu0 %v585
        %v728 = vpop.f32.mrb[0].mxu0
        %v729 = vadd.f32 0.0, %v728
        %v730 = vpop.f32.mrb[0].mxu0
        %731 = vdwg.mxu0
        %v732 = vadd.f32 %v587, %v694
        %v733 = vadd.f32 %v588, %v699
        %v734 = vadd.f32 %v589, %v704
        %v735 = vadd.f32 %v590, %v709
        %v736 = vadd.f32 %v591, %v714
        %v737 = vadd.f32 %v592, %v719
        %v738 = vadd.f32 %v593, %v724
        %v739 = vadd.f32 %v594, %v729
        %740 = vst [vmem:[%s313] sm:$0xff] %v732
        %741 = vst [vmem:[%s313 + $0x8] sm:$0xff] %v733
        %742 = vst [vmem:[%s313 + $0x10] sm:$0xff] %v734
        %743 = vst [vmem:[%s313 + $0x18] sm:$0xff] %v735
        %744 = vst [vmem:[%s313 + $0x20] sm:$0xff] %v736
        %745 = vst [vmem:[%s313 + $0x28] sm:$0xff] %v737
        %746 = vst [vmem:[%s313 + $0x30] sm:$0xff] %v738
        %747 = vst [vmem:[%s313 + $0x38] sm:$0xff] %v739
        %s748 = sand.u32 %s168, 1
        %s749 = scalar_lea.sflag [#allocation4], %s748
        %s750 = sand.u32 %s168, 1
        %s751 = smul.addr %s750, 64
        %s752 = scalar_lea.vmem [#allocation8], %s751
        // Predicated region
        $region57: #{tpu_custom_call.1} parent=39 // pred_check
          %p753 = pneg %p178
        $region58: #{tpu_custom_call.1} parent=39 // pred_check_branch
          %755 = sbr.rel (%p753) target = $region60
        $region59: #{tpu_custom_call.1} parent=39 // pred_region
          %s756 = smul.u32 8, %s27
          %s758 = ssub.s32 1024, 1024
          %759 = vsyncadd %s749, %s758
          %s760 = smul.addr %s756, 128
          %s761 = scalar_lea.hbm %s5, %s760
          %s762 = sshll.u32 %s752, 4
          %s763 = int_to_ptr.vmem [resolvable:$true] %s762
          %768 = dma.vmem_to_hbm [thread:$0]  %s763, 1024, %s761, %s749, 128, 128, 8
        $region60: #{tpu_custom_call.1} parent=39 // pred_fallthru
          _
      $region40: #{tpu_custom_call.1} parent=5 // pred_fallthru
        _
      %p769 = scmp.le.s32.totalorder 2, %s18
      // Predicated region
      $region61: #{tpu_custom_call.1} parent=5 // pred_check
        %p770 = pneg %p769
      $region62: #{tpu_custom_call.1} parent=5 // pred_check_branch
        %772 = sbr.rel (%p770) target = $region64
      $region63: #{tpu_custom_call.1} parent=5 // pred_region
        %s773 = ssub.s32 %s18, 2
        // Predicated region
        $region65: #{tpu_custom_call.1} parent=63 // pred_check
          %p774 = pneg %p184
        $region66: #{tpu_custom_call.1} parent=63 // pred_check_branch
          %776 = sbr.rel (%p774) target = $region68
        $region67: #{tpu_custom_call.1} parent=63 // pred_region
          %s777 = sand.u32 %s169, 1
          %s778 = scalar_lea.sflag [#allocation4], %s777
          %s779 = sand.u32 %s169, 1
          %s780 = smul.addr %s779, 64
          %s781 = scalar_lea.vmem [#allocation8], %s780
          %782 = dma.done %s778, 1024
        $region68: #{tpu_custom_call.1} parent=63 // pred_fallthru
          _
      $region64: #{tpu_custom_call.1} parent=5 // pred_fallthru
        _
    $region6: #{tpu_custom_call.1} parent=1 // loop_footer
      %s22 = sadd.s32 1, %s18
    $region7: #{tpu_custom_call.1} parent=1 // loop_footer_branch
      %17 = sbr.rel target = $region3
    $region8: #{tpu_custom_call.1} parent=1 // loop_exit
      _
    %783 = vsyncpa [#allocation3], 1
    %s784 = scalar_lea.sflag [#allocation3], 1
    %785 = vsyncpa %s784, 1
    %786 = vsyncpa [#allocation6], 1
    %787 = vsyncpa [#allocation4], 1
    %s788 = scalar_lea.sflag [#allocation4], 1
    %789 = vsyncpa %s788, 1

</llo_original>
